<compile_context>
chip_gen: v6e
topology: v6e:2x2x1
jax: 0.10.0
libtpu: 0.0.40
codegen_flags: <defaults>
</compile_context>

<pallas_src>
import jax
import jax.numpy as jnp
from jax import lax
from jax.experimental import pallas as pl
from jax.experimental.pallas import tpu as pltpu


# ----------------------------- small helpers -----------------------------

def _round_up(x: int, m: int) -> int:
    return (x + m - 1) // m * m


def _cdiv(a: int, b: int) -> int:
    return -(-a // b)


def _sublane(dtype) -> int:
    return 16 if jnp.dtype(dtype).itemsize == 2 else 8


def _plan_batch(B: int, dtype, b_tile_max: int = 512, min_rows_per_core: int = 64):
    """Pick (B_pad, b_tile, n_tiles) with B_pad = n_tiles * b_tile and
    B_pad - B < b_tile (never doubles the work).  Prefers >= 2 grid steps once
    there is enough work so both v7x TensorCores are busy."""
    sub = _sublane(dtype)
    n_tiles = max(_cdiv(B, b_tile_max), 1)
    if n_tiles < 2 and B >= 2 * max(sub, min_rows_per_core):
        n_tiles = 2
    b_tile = _round_up(_cdiv(B, n_tiles), sub)
    n_tiles = _cdiv(B, b_tile)
    return b_tile * n_tiles, b_tile, n_tiles


def _pad_to(a, rows: int, cols: int, dtype):
    """Zero-pad a 2-D array to (rows, cols) in `dtype` (no-op if already there)."""
    if a.shape == (rows, cols) and a.dtype == jnp.dtype(dtype):
        return a
    out = jnp.zeros((rows, cols), dtype)
    return out.at[: a.shape[0], : a.shape[1]].set(a.astype(dtype))


def _vmem_limit_bytes(estimate: int) -> int:
    # Give the estimate 2x headroom, never below the usual 32 MiB scoped
    # default, never above v7x's 64 MiB physical VMEM per TensorCore.
    return int(min(max(2 * estimate, 32 << 20), 64 << 20))


# ------------------------------ param packing -----------------------------

def prepare_rnn_cell_params(wx, bx, wh, bh, *, compute_dtype=jnp.float32):
    """One-time packing of PyTorch-layout params into the kernel layout.

    wx : (hidden, input)  nn.Linear weight (out, in);  wh : (hidden, hidden)
    bx, bh : (hidden,)

    Returns:
      wxT : (I_pad, H_pad)  = Wx^T zero-padded, in compute_dtype   (K, N) layout
      whT : (H_pad, H_pad)  = Wh^T zero-padded, in compute_dtype   (K, N) layout
      b   : (1, H_pad)      = bx + bh zero-padded, kept in f32 (bias add + tanh
                              are done in f32 in the kernel).
    """
    hidden_dim, input_dim = wx.shape
    i_pd = _round_up(input_dim, 128)
    h_pd = _round_up(hidden_dim, 128)

    wxT = jnp.zeros((i_pd, h_pd), compute_dtype)
    wxT = wxT.at[:input_dim, :hidden_dim].set(wx.T.astype(compute_dtype))
    whT = jnp.zeros((h_pd, h_pd), compute_dtype)
    whT = whT.at[:hidden_dim, :hidden_dim].set(wh.T.astype(compute_dtype))
    b = jnp.zeros((1, h_pd), jnp.float32)
    b = b.at[0, :hidden_dim].set((bx + bh).astype(jnp.float32))
    return wxT, whT, b


# -------------------------------- kernels ---------------------------------

def _rnn_cell_kernel(x_ref, h_ref, wxT_ref, whT_ref, b_ref, out_ref):
    # Two clean (M,K)x(K,N) MXU contractions (weights pre-transposed, K and N
    # lane-aligned), f32 accumulation; bias add + tanh in f32.
    acc = lax.dot_general(
        x_ref[...], wxT_ref[...],
        dimension_numbers=(((1,), (0,)), ((), ())),
        preferred_element_type=jnp.float32,
    )
    acc = acc + lax.dot_general(
        h_ref[...], whT_ref[...],
        dimension_numbers=(((1,), (0,)), ((), ())),
        preferred_element_type=jnp.float32,
    )
    out_ref[...] = jnp.tanh(acc + b_ref[...]).astype(out_ref.dtype)


def _rnn_seq_kernel(x_ref, h0_ref, wxT_ref, whT_ref, b_ref, hs_ref, h_sc):
    # Timestep loop hoisted into the grid: grid = (batch_tiles, T).
    # Weights/bias have constant index_maps (DMA'd once, VMEM-resident);
    # h is carried across T in f32 VMEM scratch.
    @pl.when(pl.program_id(1) == 0)
    def _():
        h_sc[...] = h0_ref[...].astype(jnp.float32)

    acc = lax.dot_general(
        x_ref[0], wxT_ref[...],
        dimension_numbers=(((1,), (0,)), ((), ())),
        preferred_element_type=jnp.float32,
    )
    acc = acc + lax.dot_general(
        h_sc[...].astype(whT_ref.dtype), whT_ref[...],
        dimension_numbers=(((1,), (0,)), ((), ())),
        preferred_element_type=jnp.float32,
    )
    h_new = jnp.tanh(acc + b_ref[...])
    h_sc[...] = h_new
    hs_ref[0] = h_new.astype(hs_ref.dtype)


# ------------------------------ pallas calls ------------------------------

def _cell_call(x_p, h_p, wxT, whT, b, b_tile, n_tiles, out_dtype):
    B_pad, i_pd = x_p.shape
    h_pd = whT.shape[1]
    itemsize = jnp.dtype(wxT.dtype).itemsize
    out_itemsize = jnp.dtype(out_dtype).itemsize

    flops = 2 * B_pad * (i_pd + h_pd) * h_pd
    bytes_accessed = ((B_pad * i_pd + B_pad * h_pd) * itemsize
                      + (i_pd + h_pd) * h_pd * itemsize
                      + h_pd * 4
                      + B_pad * h_pd * out_itemsize)
    vmem_est = (2 * b_tile * (i_pd + h_pd) * itemsize        # x / h tiles (dbl-buf)
                + 2 * (i_pd + h_pd) * h_pd * itemsize        # weights (worst case)
                + 2 * h_pd * 4                               # bias
                + 2 * b_tile * h_pd * out_itemsize)          # output tiles

    return pl.pallas_call(
        _rnn_cell_kernel,
        out_shape=jax.ShapeDtypeStruct((B_pad, h_pd), out_dtype),
        grid_spec=pltpu.PrefetchScalarGridSpec(
            num_scalar_prefetch=0,
            grid=(n_tiles,),
            in_specs=[
                pl.BlockSpec((b_tile, i_pd), lambda i: (i, 0)),   # x: batch-tiled
                pl.BlockSpec((b_tile, h_pd), lambda i: (i, 0)),   # h: batch-tiled
                # Constant-index blocks stay VMEM-resident across the grid.
                pl.BlockSpec((i_pd, h_pd), lambda i: (0, 0)),     # Wx^T
                pl.BlockSpec((h_pd, h_pd), lambda i: (0, 0)),     # Wh^T
                pl.BlockSpec((1, h_pd), lambda i: (0, 0)),        # bias
            ],
            out_specs=pl.BlockSpec((b_tile, h_pd), lambda i: (i, 0)),
        ),
        compiler_params=pltpu.CompilerParams(
            dimension_semantics=("parallel",),
            vmem_limit_bytes=_vmem_limit_bytes(vmem_est),
        ),
        cost_estimate=pl.CostEstimate(
            flops=flops,
            transcendentals=B_pad * h_pd,
            bytes_accessed=bytes_accessed,
        ),
    )(x_p, h_p, wxT, whT, b)


def rnn_cell_step(x_p, h_p, wxT, whT, b, *, b_tile_max=512, out_dtype=None):
    """Hot-path single step on PRE-PADDED activations.

    x_p : (B_pad, I_pad), h_p : (B_pad, H_pad) in the weights' compute dtype.
    Returns h_new : (B_pad, H_pad).  Padded hidden lanes stay exactly zero so
    the result chains directly into the next step (no per-step concat / pad /
    slice HBM round trips).
    """
    dtype = wxT.dtype
    out_dtype = dtype if out_dtype is None else out_dtype
    rows = x_p.shape[0]
    B_pad, b_tile, n_tiles = _plan_batch(rows, dtype, b_tile_max)
    if B_pad != rows:  # caller used a row count the planner would not pick
        x_p = _pad_to(x_p, B_pad, wxT.shape[0], dtype)
        h_p = _pad_to(h_p, B_pad, whT.shape[1], dtype)
    return _cell_call(x_p, h_p, wxT, whT, b, b_tile, n_tiles, out_dtype)


def rnn_sequence(xs, h0, wxT, whT, b, *, b_tile_max=512, out_dtype=jnp.float32):
    """Full-sequence RNN with the timestep loop inside ONE pallas_call.

    xs : (T, B, input_dim), h0 : (B, hidden_dim).
    Returns hs : (T, B, hidden_dim) (hidden state after every step).
    Weights are DMA'd into VMEM once per sequence; h is carried in VMEM scratch.
    """
    dtype = wxT.dtype
    T, B, in_dim = xs.shape
    hid = h0.shape[1]
    i_pd, h_pd = wxT.shape[0], whT.shape[1]

    B_pad, b_tile, n_tiles = _plan_batch(B, dtype, b_tile_max)

    # Per-sequence (not per-step) padding into lane/sublane-aligned slabs.
    xs_p = jnp.zeros((T, B_pad, i_pd), dtype).at[:, :B, :in_dim].set(xs.astype(dtype))
    h0_p = jnp.zeros((B_pad, h_pd), dtype).at[:B, :hid].set(h0.astype(dtype))

    itemsize = jnp.dtype(dtype).itemsize
    out_itemsize = jnp.dtype(out_dtype).itemsize
    flops = 2 * T * B_pad * (i_pd + h_pd) * h_pd
    bytes_accessed = ((T * B_pad * i_pd + B_pad * h_pd) * itemsize
                      + (i_pd + h_pd) * h_pd * itemsize
                      + h_pd * 4
                      + T * B_pad * h_pd * out_itemsize)
    vmem_est = (2 * b_tile * i_pd * itemsize                 # x blocks (dbl-buf)
                + 2 * b_tile * h_pd * itemsize               # h0 block
                + 2 * (i_pd + h_pd) * h_pd * itemsize        # weights
                + 2 * h_pd * 4                               # bias
                + 2 * b_tile * h_pd * out_itemsize           # output blocks
                + b_tile * h_pd * 4)                         # h carry scratch

    hs_p = pl.pallas_call(
        _rnn_seq_kernel,
        out_shape=jax.ShapeDtypeStruct((T, B_pad, h_pd), out_dtype),
        grid_spec=pltpu.PrefetchScalarGridSpec(
            num_scalar_prefetch=0,
            grid=(n_tiles, T),
            in_specs=[
                pl.BlockSpec((1, b_tile, i_pd), lambda i, t: (t, i, 0)),  # x_t tile
                pl.BlockSpec((b_tile, h_pd), lambda i, t: (i, 0)),        # h0 tile
                pl.BlockSpec((i_pd, h_pd), lambda i, t: (0, 0)),          # Wx^T
                pl.BlockSpec((h_pd, h_pd), lambda i, t: (0, 0)),          # Wh^T
                pl.BlockSpec((1, h_pd), lambda i, t: (0, 0)),             # bias
            ],
            out_specs=pl.BlockSpec((1, b_tile, h_pd), lambda i, t: (t, i, 0)),
            scratch_shapes=[pltpu.VMEM((b_tile, h_pd), jnp.float32)],
        ),
        compiler_params=pltpu.CompilerParams(
            dimension_semantics=("parallel", "arbitrary"),
            vmem_limit_bytes=_vmem_limit_bytes(vmem_est),
        ),
        cost_estimate=pl.CostEstimate(
            flops=flops,
            transcendentals=T * B_pad * h_pd,
            bytes_accessed=bytes_accessed,
        ),
    )(xs_p, h0_p, wxT, whT, b)

    return hs_p[:, :B, :hid]


def rnn_cell(x, h, wx, bx, wh, bh, *, compute_dtype=jnp.float32):
    """Drop-in single-step forward matching the PyTorch RNNCell.

    NOTE: repacks/pads params and activations every call — convenience /
    correctness-check only.  Real callers should call prepare_rnn_cell_params()
    once and use rnn_cell_step / rnn_sequence on pre-padded activations.
    """
    hidden_dim, _ = wx.shape
    wxT, whT, b = prepare_rnn_cell_params(wx, bx, wh, bh, compute_dtype=compute_dtype)
    B = x.shape[0]
    B_pad, b_tile, n_tiles = _plan_batch(B, compute_dtype)
    x_p = _pad_to(x, B_pad, wxT.shape[0], compute_dtype)
    h_p = _pad_to(h, B_pad, whT.shape[1], compute_dtype)
    out = _cell_call(x_p, h_p, wxT, whT, b, b_tile, n_tiles, jnp.float32)
    return out[:B, :hidden_dim]


# ------------------------------- reference --------------------------------

def rnn_cell_ref(x, h, wx, bx, wh, bh):
    """Pure-JAX reference matching PyTorch semantics (f32-exact matmuls)."""
    h1 = jnp.dot(h, wh.T, precision=lax.Precision.HIGHEST) + bh
    h2 = jnp.dot(x, wx.T, precision=lax.Precision.HIGHEST) + bx
    return jnp.tanh(h1 + h2)


# ---------------------------------- demo ----------------------------------

if __name__ == "__main__":
    input_dim = 16
    hidden_dim = 32
    batch = 8
    seq_len = 8

    key = jax.random.PRNGKey(0)
    kx, kh, kwx, kbx, kwh, kbh, kxs = jax.random.split(key, 7)

    x = jax.random.normal(kx, (batch, input_dim), dtype=jnp.float32)
    h = jax.random.normal(kh, (batch, hidden_dim), dtype=jnp.float32)
    xs = jax.random.normal(kxs, (seq_len, batch, input_dim), dtype=jnp.float32)

    # nn.Linear-style uniform(-1/sqrt(fan_in), 1/sqrt(fan_in)) init.
    bound_x = 1.0 / (input_dim ** 0.5)
    bound_h = 1.0 / (hidden_dim ** 0.5)
    wx = jax.random.uniform(kwx, (hidden_dim, input_dim), jnp.float32, -bound_x, bound_x)
    bx = jax.random.uniform(kbx, (hidden_dim,), jnp.float32, -bound_x, bound_x)
    wh = jax.random.uniform(kwh, (hidden_dim, hidden_dim), jnp.float32, -bound_h, bound_h)
    bh = jax.random.uniform(kbh, (hidden_dim,), jnp.float32, -bound_h, bound_h)

    ref = rnn_cell_ref(x, h, wx, bx, wh, bh)

    # ---- f32 single cell via the drop-in wrapper ----
    out = jax.block_until_ready(rnn_cell(x, h, wx, bx, wh, bh))
    assert out.shape == (batch, hidden_dim)
    assert jnp.allclose(out, ref, atol=1e-5, rtol=1e-5), "cell mismatch vs reference"

    # ---- f32 hot-path step on pre-padded activations (no per-step copies) ----
    wxT, whT, b = prepare_rnn_cell_params(wx, bx, wh, bh)
    i_pd, h_pd = wxT.shape[0], whT.shape[1]
    B_pad, _, _ = _plan_batch(batch, wxT.dtype)
    x_p = _pad_to(x, B_pad, i_pd, wxT.dtype)
    h_p = _pad_to(h, B_pad, h_pd, wxT.dtype)
    out_step = jax.block_until_ready(rnn_cell_step(x_p, h_p, wxT, whT, b))
    assert jnp.allclose(out_step[:batch, :hidden_dim], ref, atol=1e-5, rtol=1e-5), \
        "step mismatch vs reference"

    # ---- f32 full sequence: timestep loop inside one pallas_call vs scan ----
    def scan_ref(xs_, h0_):
        def step(hc, xt):
            hn = rnn_cell_ref(xt, hc, wx, bx, wh, bh)
            return hn, hn
        _, hs_ = lax.scan(step, h0_, xs_)
        return hs_

    hs_ref = scan_ref(xs, h)
    hs = jax.block_until_ready(rnn_sequence(xs, h, wxT, whT, b))
    assert hs.shape == (seq_len, batch, hidden_dim)
    assert jnp.allclose(hs, hs_ref, atol=1e-4, rtol=1e-4), "sequence mismatch vs scan reference"

    # ---- bf16 MXU path (f32 accumulation, f32 bias+tanh), relaxed tolerance ----
    out_bf16 = jax.block_until_ready(
        rnn_cell(x, h, wx, bx, wh, bh, compute_dtype=jnp.bfloat16))
    assert jnp.allclose(out_bf16, ref, atol=5e-2, rtol=5e-2), "bf16 cell mismatch vs reference"

    print("KERNEL_OK")
</pallas_src>

<mosaic_0001>
module attributes {stable_mosaic.version = 11 : i64} {
  func.func @_rnn_cell_kernel(%arg0: i32, %arg1: memref<8x128xf32, #tpu.memory_space<vmem>>, %arg2: memref<8x128xf32, #tpu.memory_space<vmem>>, %arg3: memref<128x128xf32, #tpu.memory_space<vmem>>, %arg4: memref<128x128xf32, #tpu.memory_space<vmem>>, %arg5: memref<1x128xf32, #tpu.memory_space<vmem>>, %arg6: memref<8x128xf32, #tpu.memory_space<vmem>>) attributes {dimension_semantics = [#tpu.dimension_semantics<parallel>], iteration_bounds = array<i64: 1>, scalar_prefetch = 0 : i64, scratch_operands = 0 : i64, tpu.core_type = #tpu.core_type<tc>, window_params = [{transform_indices = @transform_0, window_bounds = array<i64: 8, 128>}, {transform_indices = @transform_1, window_bounds = array<i64: 8, 128>}, {pipeline_mode = #tpu.pipeline_mode<synchronous>, transform_indices = @transform_2, window_bounds = array<i64: 128, 128>}, {pipeline_mode = #tpu.pipeline_mode<synchronous>, transform_indices = @transform_3, window_bounds = array<i64: 128, 128>}, {pipeline_mode = #tpu.pipeline_mode<synchronous>, transform_indices = @transform_4, window_bounds = array<i64: 1, 128>}, {transform_indices = @transform_5, window_bounds = array<i64: 8, 128>}]} {
    %c0 = arith.constant 0 : index
    %c0_0 = arith.constant 0 : index
    %0 = vector.load %arg1[%c0, %c0_0] : memref<8x128xf32, #tpu.memory_space<vmem>>, vector<8x128xf32>
    %c0_1 = arith.constant 0 : index
    %c0_2 = arith.constant 0 : index
    %1 = vector.load %arg3[%c0_1, %c0_2] : memref<128x128xf32, #tpu.memory_space<vmem>>, vector<128x128xf32>
    %cst = arith.constant dense<0.000000e+00> : vector<8x128xf32>
    %2 = tpu.matmul %0, %1, %cst {dimension_numbers = #tpu.dot_dimension_numbers<[1], [0], [0], [1], [0, 0, 1, 1], [], []>} : vector<8x128xf32>, vector<128x128xf32>, vector<8x128xf32> -> vector<8x128xf32>
    %c0_3 = arith.constant 0 : index
    %c0_4 = arith.constant 0 : index
    %3 = vector.load %arg2[%c0_3, %c0_4] : memref<8x128xf32, #tpu.memory_space<vmem>>, vector<8x128xf32>
    %c0_5 = arith.constant 0 : index
    %c0_6 = arith.constant 0 : index
    %4 = vector.load %arg4[%c0_5, %c0_6] : memref<128x128xf32, #tpu.memory_space<vmem>>, vector<128x128xf32>
    %cst_7 = arith.constant dense<0.000000e+00> : vector<8x128xf32>
    %5 = tpu.matmul %3, %4, %cst_7 {dimension_numbers = #tpu.dot_dimension_numbers<[1], [0], [0], [1], [0, 0, 1, 1], [], []>} : vector<8x128xf32>, vector<128x128xf32>, vector<8x128xf32> -> vector<8x128xf32>
    %6 = arith.addf %2, %5 : vector<8x128xf32>
    %c0_8 = arith.constant 0 : index
    %c0_9 = arith.constant 0 : index
    %7 = vector.load %arg5[%c0_8, %c0_9] : memref<1x128xf32, #tpu.memory_space<vmem>>, vector<1x128xf32>
    %8 = vector.broadcast %7 : vector<1x128xf32> to vector<8x128xf32>
    %9 = arith.addf %6, %8 : vector<8x128xf32>
    %10 = math.tanh %9 : vector<8x128xf32>
    %c0_10 = arith.constant 0 : index
    %c0_11 = arith.constant 0 : index
    %11 = vector.load %arg6[%c0_10, %c0_11] : memref<8x128xf32, #tpu.memory_space<vmem>>, vector<8x128xf32>
    tpu.vector_store %arg6[%c0_10, %c0_11], %10 {strides = array<i32>} : memref<8x128xf32, #tpu.memory_space<vmem>>, vector<8x128xf32>,
    return
  }
  func.func @transform_0(%arg0: i32) -> (i32, i32) {
    %c0_i32 = arith.constant 0 : i32
    %c0_i32_0 = arith.constant 0 : i32
    return %arg0, %c0_i32 : i32, i32
  }
  func.func @transform_1(%arg0: i32) -> (i32, i32) {
    %c0_i32 = arith.constant 0 : i32
    %c0_i32_0 = arith.constant 0 : i32
    return %arg0, %c0_i32 : i32, i32
  }
  func.func @transform_2(%arg0: i32) -> (i32, i32) {
    %c0_i32 = arith.constant 0 : i32
    %c0_i32_0 = arith.constant 0 : i32
    %c0_i32_1 = arith.constant 0 : i32
    return %c0_i32, %c0_i32_0 : i32, i32
  }
  func.func @transform_3(%arg0: i32) -> (i32, i32) {
    %c0_i32 = arith.constant 0 : i32
    %c0_i32_0 = arith.constant 0 : i32
    %c0_i32_1 = arith.constant 0 : i32
    return %c0_i32, %c0_i32_0 : i32, i32
  }
  func.func @transform_4(%arg0: i32) -> (i32, i32) {
    %c0_i32 = arith.constant 0 : i32
    %c0_i32_0 = arith.constant 0 : i32
    %c0_i32_1 = arith.constant 0 : i32
    return %c0_i32, %c0_i32_0 : i32, i32
  }
  func.func @transform_5(%arg0: i32) -> (i32, i32) {
    %c0_i32 = arith.constant 0 : i32
    %c0_i32_0 = arith.constant 0 : i32
    return %arg0, %c0_i32 : i32, i32
  }
}

</mosaic_0001>

<llo_original>
// kernel: tpu_custom_call.1
$region0: #{tpu_custom_call.1}
  #allocation0 [shape = 'u32[]', space=smem, size = 0x4, offset = 0x4, fixed_abs, tag = 'smem constant byte address 0x4 - core index']
  #allocation1 [shape = 'u32[144,128]{1,0:T(1,128)}', space=vmem, size = 0x12000, scoped, tag = 'internal scratch']
  %s0 = inlined_call_operand.hbm [shape: f32[8,128], index: 0, kind: input, shape index: {}]
  %s1 = inlined_call_operand.hbm [shape: f32[8,128], index: 1, kind: input, shape index: {}]
  %s2 = inlined_call_operand.hbm [shape: f32[128,128], index: 2, kind: input, shape index: {}]
  %s3 = inlined_call_operand.hbm [shape: f32[128,128], index: 3, kind: input, shape index: {}]
  %s4 = inlined_call_operand.vmem [shape: f32[1,128], index: 4, kind: input, shape index: {}]
  %s5 = inlined_call_operand.hbm [shape: f32[8,128], index: 5, kind: output, shape index: {}]
  %s6 = sld [smem:[#allocation0]]
  $region46: #{tpu_custom_call.1} parent=0
    _
  %s8 = ssub.s32 1, %s6
  %s9 = scalar_select 0, %s8, %s6
  $region1: #{tpu_custom_call.1} parent=0
    #allocation2 [shape = 'u8[4096]{0}', space=vmem, size = 0x1000, scoped, tag = 'input window, operand 0, single buffered']
    #allocation3 [shape = 's32[1]{0}', space=sflag, size = 0x4, scoped, tag = 'scoped memory for tpu_custom_call.1']
    #allocation4 [shape = 's32[1]{0}', space=sflag, size = 0x4, scoped, tag = 'scoped memory for tpu_custom_call.1']
    #allocation5 [shape = 'u8[4096]{0}', space=vmem, size = 0x1000, scoped, tag = 'input window, operand 1, single buffered']
    #allocation6 [shape = 's32[1]{0}', space=sflag, size = 0x4, scoped, tag = 'scoped memory for tpu_custom_call.1']
    #allocation7 [shape = 'u8[65536]{0}', space=vmem, size = 0x10000, scoped, tag = 'input window, operand 2, single buffered']
    #allocation8 [shape = 'u8[65536]{0}', space=vmem, size = 0x10000, scoped, tag = 'input window, operand 3, single buffered']
    #allocation9 [shape = 's32[1]{0}', space=sflag, size = 0x4, scoped, tag = 'scoped memory for tpu_custom_call.1']
    #allocation10 [shape = 'u8[4096]{0}', space=vmem, size = 0x1000, scoped, tag = 'output window, operand 0, single buffered']
    %10 = vsyncpa [#allocation3], 0
    %11 = vsyncpa [#allocation6], 0
    %12 = vsyncpa [#allocation9], 0
    %13 = vsyncpa [#allocation4], 0
    // Predicated region
    $region2: #{tpu_custom_call.1} parent=1 // pred_check
      _
    $region3: #{tpu_custom_call.1} parent=1 // pred_check_branch
      %15 = sbr.rel (0) target = $region5
    $region4: #{tpu_custom_call.1} parent=1 // pred_region
      %s17 = ssub.s32 128, 128
      %18 = vsyncadd [#allocation3], %s17
      %s20 = sshll.u32 [#allocation2], 4
      %s21 = int_to_ptr.vmem [resolvable:$true] %s20
      %23 = dma.hbm_to_vmem [thread:$0]  %s0, 128, %s21, [#allocation3]
    $region5: #{tpu_custom_call.1} parent=1 // pred_fallthru
      _
    // Predicated region
    $region6: #{tpu_custom_call.1} parent=1 // pred_check
      _
    $region7: #{tpu_custom_call.1} parent=1 // pred_check_branch
      %25 = sbr.rel (0) target = $region9
    $region8: #{tpu_custom_call.1} parent=1 // pred_region
      %s27 = ssub.s32 128, 128
      %28 = vsyncadd [#allocation6], %s27
      %s30 = sshll.u32 [#allocation5], 4
      %s31 = int_to_ptr.vmem [resolvable:$true] %s30
      %33 = dma.hbm_to_vmem [thread:$0]  %s1, 128, %s31, [#allocation6]
    $region9: #{tpu_custom_call.1} parent=1 // pred_fallthru
      _
    // Predicated region
    $region10: #{tpu_custom_call.1} parent=1 // pred_check
      _
    $region11: #{tpu_custom_call.1} parent=1 // pred_check_branch
      %35 = sbr.rel (0) target = $region13
    $region12: #{tpu_custom_call.1} parent=1 // pred_region
      %s37 = ssub.s32 2048, 2048
      %38 = vsyncadd [#allocation6], %s37
      %s39 = sshll.u32 [#allocation7], 4
      %s40 = int_to_ptr.vmem [resolvable:$true] %s39
      %45 = dma.hbm_to_vmem [thread:$0]  %s2, 2048, %s40, [#allocation6], 128, 128, 8
    $region13: #{tpu_custom_call.1} parent=1 // pred_fallthru
      _
    // Predicated region
    $region14: #{tpu_custom_call.1} parent=1 // pred_check
      _
    $region15: #{tpu_custom_call.1} parent=1 // pred_check_branch
      %47 = sbr.rel (0) target = $region17
    $region16: #{tpu_custom_call.1} parent=1 // pred_region
      %s49 = ssub.s32 2048, 2048
      %50 = vsyncadd [#allocation9], %s49
      %s51 = sshll.u32 [#allocation8], 4
      %s52 = int_to_ptr.vmem [resolvable:$true] %s51
      %57 = dma.hbm_to_vmem [thread:$0]  %s3, 2048, %s52, [#allocation9], 128, 128, 8
    $region17: #{tpu_custom_call.1} parent=1 // pred_fallthru
      _
    // Predicated region
    $region18: #{tpu_custom_call.1} parent=1 // pred_check
      _
    $region19: #{tpu_custom_call.1} parent=1 // pred_check_branch
      %59 = sbr.rel (0) target = $region21
    $region20: #{tpu_custom_call.1} parent=1 // pred_region
      _
    $region21: #{tpu_custom_call.1} parent=1 // pred_fallthru
      _
    // Predicated region
    $region22: #{tpu_custom_call.1} parent=1 // pred_check
      _
    $region23: #{tpu_custom_call.1} parent=1 // pred_check_branch
      %61 = sbr.rel (0) target = $region25
    $region24: #{tpu_custom_call.1} parent=1 // pred_region
      %62 = dma.done [#allocation3], 128
    $region25: #{tpu_custom_call.1} parent=1 // pred_fallthru
      _
    // Predicated region
    $region26: #{tpu_custom_call.1} parent=1 // pred_check
      _
    $region27: #{tpu_custom_call.1} parent=1 // pred_check_branch
      %64 = sbr.rel (0) target = $region29
    $region28: #{tpu_custom_call.1} parent=1 // pred_region
      %65 = dma.done [#allocation6], 128
    $region29: #{tpu_custom_call.1} parent=1 // pred_fallthru
      _
    // Predicated region
    $region30: #{tpu_custom_call.1} parent=1 // pred_check
      _
    $region31: #{tpu_custom_call.1} parent=1 // pred_check_branch
      %67 = sbr.rel (0) target = $region33
    $region32: #{tpu_custom_call.1} parent=1 // pred_region
      %68 = dma.done [#allocation6], 2048
    $region33: #{tpu_custom_call.1} parent=1 // pred_fallthru
      _
    // Predicated region
    $region34: #{tpu_custom_call.1} parent=1 // pred_check
      _
    $region35: #{tpu_custom_call.1} parent=1 // pred_check_branch
      %70 = sbr.rel (0) target = $region37
    $region36: #{tpu_custom_call.1} parent=1 // pred_region
      %71 = dma.done [#allocation9], 2048
    $region37: #{tpu_custom_call.1} parent=1 // pred_fallthru
      _
    %v72 = vld [vmem:[#allocation2] sm:$0xff]
    %v73 = vld [vmem:[#allocation7] sm:$0xff]
    %v74 = vld [vmem:[#allocation7 + $0x8] sm:$0xff]
    %v75 = vld [vmem:[#allocation7 + $0x10] sm:$0xff]
    %v76 = vld [vmem:[#allocation7 + $0x18] sm:$0xff]
    %v77 = vld [vmem:[#allocation7 + $0x20] sm:$0xff]
    %v78 = vld [vmem:[#allocation7 + $0x28] sm:$0xff]
    %v79 = vld [vmem:[#allocation7 + $0x30] sm:$0xff]
    %v80 = vld [vmem:[#allocation7 + $0x38] sm:$0xff]
    %v81 = vld [vmem:[#allocation7 + $0x40] sm:$0xff]
    %v82 = vld [vmem:[#allocation7 + $0x48] sm:$0xff]
    %v83 = vld [vmem:[#allocation7 + $0x50] sm:$0xff]
    %v84 = vld [vmem:[#allocation7 + $0x58] sm:$0xff]
    %v85 = vld [vmem:[#allocation7 + $0x60] sm:$0xff]
    %v86 = vld [vmem:[#allocation7 + $0x68] sm:$0xff]
    %v87 = vld [vmem:[#allocation7 + $0x70] sm:$0xff]
    %v88 = vld [vmem:[#allocation7 + $0x78] sm:$0xff]
    %v89 = vld [vmem:[#allocation5] sm:$0xff]
    %v90 = vld [vmem:[#allocation8] sm:$0xff]
    %v91 = vld [vmem:[#allocation8 + $0x8] sm:$0xff]
    %v92 = vld [vmem:[#allocation8 + $0x10] sm:$0xff]
    %v93 = vld [vmem:[#allocation8 + $0x18] sm:$0xff]
    %v94 = vld [vmem:[#allocation8 + $0x20] sm:$0xff]
    %v95 = vld [vmem:[#allocation8 + $0x28] sm:$0xff]
    %v96 = vld [vmem:[#allocation8 + $0x30] sm:$0xff]
    %v97 = vld [vmem:[#allocation8 + $0x38] sm:$0xff]
    %v98 = vld [vmem:[#allocation8 + $0x40] sm:$0xff]
    %v99 = vld [vmem:[#allocation8 + $0x48] sm:$0xff]
    %v100 = vld [vmem:[#allocation8 + $0x50] sm:$0xff]
    %v101 = vld [vmem:[#allocation8 + $0x58] sm:$0xff]
    %v102 = vld [vmem:[#allocation8 + $0x60] sm:$0xff]
    %v103 = vld [vmem:[#allocation8 + $0x68] sm:$0xff]
    %v104 = vld [vmem:[#allocation8 + $0x70] sm:$0xff]
    %v105 = vld [vmem:[#allocation8 + $0x78] sm:$0xff]
    %106 = vmatprep.subr.mxu0 0.0
    %107 = vmatpush1.msra.mxu0 %v105
    %108 = vmatprep.subr.mxu0 0.0
    %109 = vmatpush1.msra.mxu0 %v104
    %110 = vmatprep.subr.mxu0 0.0
    %111 = vmatpush1.msra.mxu0 %v103
    %112 = vmatprep.subr.mxu0 0.0
    %113 = vmatpush1.msra.mxu0 %v102
    %114 = vmatprep.subr.mxu0 0.0
    %115 = vmatpush1.msra.mxu0 %v101
    %116 = vmatprep.subr.mxu0 0.0
    %117 = vmatpush1.msra.mxu0 %v100
    %118 = vmatprep.subr.mxu0 0.0
    %119 = vmatpush1.msra.mxu0 %v99
    %120 = vmatprep.subr.mxu0 0.0
    %121 = vmatpush1.msra.mxu0 %v98
    %122 = vmatprep.subr.mxu0 0.0
    %123 = vmatpush1.msra.mxu0 %v97
    %124 = vmatprep.subr.mxu0 0.0
    %125 = vmatpush1.msra.mxu0 %v96
    %126 = vmatprep.subr.mxu0 0.0
    %127 = vmatpush1.msra.mxu0 %v95
    %128 = vmatprep.subr.mxu0 0.0
    %129 = vmatpush1.msra.mxu0 %v94
    %130 = vmatprep.subr.mxu0 0.0
    %131 = vmatpush1.msra.mxu0 %v93
    %132 = vmatprep.subr.mxu0 0.0
    %133 = vmatpush1.msra.mxu0 %v92
    %134 = vmatprep.subr.mxu0 0.0
    %135 = vmatpush1.msra.mxu0 %v91
    %136 = vmatprep.subr.mxu0 0.0
    %137 = vmatpush1.msra.mxu0 %v90
    %138 = vmatprep.subr.mxu0 0.0
    %139 = vmatpush2.msra.mxu0 0.0
    %140 = vmatprep.subr.mxu0 0.0
    %141 = vmatpush2.msra.mxu0 0.0
    %142 = vmatprep.subr.mxu0 0.0
    %143 = vmatpush2.msra.mxu0 0.0
    %144 = vmatprep.subr.mxu0 0.0
    %145 = vmatpush2.msra.mxu0 0.0
    %146 = vmatprep.subr.mxu0 0.0
    %147 = vmatpush2.msra.mxu0 0.0
    %148 = vmatprep.subr.mxu0 0.0
    %149 = vmatpush2.msra.mxu0 0.0
    %150 = vmatprep.subr.mxu0 0.0
    %151 = vmatpush2.msra.mxu0 0.0
    %152 = vmatprep.subr.mxu0 0.0
    %153 = vmatpush2.msra.mxu0 0.0
    %154 = vmatprep.subr.mxu0 0.0
    %155 = vmatpush2.msra.mxu0 0.0
    %156 = vmatprep.subr.mxu0 0.0
    %157 = vmatpush2.msra.mxu0 0.0
    %158 = vmatprep.subr.mxu0 0.0
    %159 = vmatpush2.msra.mxu0 0.0
    %160 = vmatprep.subr.mxu0 0.0
    %161 = vmatpush2.msra.mxu0 0.0
    %162 = vmatprep.subr.mxu0 0.0
    %163 = vmatpush2.msra.mxu0 0.0
    %164 = vmatprep.subr.mxu0 0.0
    %165 = vmatpush2.msra.mxu0 0.0
    %166 = vmatprep.subr.mxu0 0.0
    %167 = vmatpush2.msra.mxu0 0.0
    %168 = vmatprep.subr.mxu0 0.0
    %169 = vmatpush2.msra.mxu0 0.0
    %170 = vmatprep.mubr.f32.mxu0 0.0
    %171 = vmatmul.mubr.f32.gmra.mxu0 %v89
    %v172 = vpop.f32.mrf.mxu0
    %v173 = vadd.f32 0.0, %v172
    %v174 = vpop.f32.mrf.mxu0
    %175 = vdwg.mxu0
    %176 = vmatprep.subr.mxu0 0.0
    %177 = vmatpush1.msra.mxu0 %v88
    %178 = vmatprep.subr.mxu0 0.0
    %179 = vmatpush1.msra.mxu0 %v87
    %180 = vmatprep.subr.mxu0 0.0
    %181 = vmatpush1.msra.mxu0 %v86
    %182 = vmatprep.subr.mxu0 0.0
    %183 = vmatpush1.msra.mxu0 %v85
    %184 = vmatprep.subr.mxu0 0.0
    %185 = vmatpush1.msra.mxu0 %v84
    %186 = vmatprep.subr.mxu0 0.0
    %187 = vmatpush1.msra.mxu0 %v83
    %188 = vmatprep.subr.mxu0 0.0
    %189 = vmatpush1.msra.mxu0 %v82
    %190 = vmatprep.subr.mxu0 0.0
    %191 = vmatpush1.msra.mxu0 %v81
    %192 = vmatprep.subr.mxu0 0.0
    %193 = vmatpush1.msra.mxu0 %v80
    %194 = vmatprep.subr.mxu0 0.0
    %195 = vmatpush1.msra.mxu0 %v79
    %196 = vmatprep.subr.mxu0 0.0
    %197 = vmatpush1.msra.mxu0 %v78
    %198 = vmatprep.subr.mxu0 0.0
    %199 = vmatpush1.msra.mxu0 %v77
    %200 = vmatprep.subr.mxu0 0.0
    %201 = vmatpush1.msra.mxu0 %v76
    %202 = vmatprep.subr.mxu0 0.0
    %203 = vmatpush1.msra.mxu0 %v75
    %204 = vmatprep.subr.mxu0 0.0
    %205 = vmatpush1.msra.mxu0 %v74
    %206 = vmatprep.subr.mxu0 0.0
    %207 = vmatpush1.msra.mxu0 %v73
    %208 = vmatprep.subr.mxu0 0.0
    %209 = vmatpush2.msra.mxu0 0.0
    %210 = vmatprep.subr.mxu0 0.0
    %211 = vmatpush2.msra.mxu0 0.0
    %212 = vmatprep.subr.mxu0 0.0
    %213 = vmatpush2.msra.mxu0 0.0
    %214 = vmatprep.subr.mxu0 0.0
    %215 = vmatpush2.msra.mxu0 0.0
    %216 = vmatprep.subr.mxu0 0.0
    %217 = vmatpush2.msra.mxu0 0.0
    %218 = vmatprep.subr.mxu0 0.0
    %219 = vmatpush2.msra.mxu0 0.0
    %220 = vmatprep.subr.mxu0 0.0
    %221 = vmatpush2.msra.mxu0 0.0
    %222 = vmatprep.subr.mxu0 0.0
    %223 = vmatpush2.msra.mxu0 0.0
    %224 = vmatprep.subr.mxu0 0.0
    %225 = vmatpush2.msra.mxu0 0.0
    %226 = vmatprep.subr.mxu0 0.0
    %227 = vmatpush2.msra.mxu0 0.0
    %228 = vmatprep.subr.mxu0 0.0
    %229 = vmatpush2.msra.mxu0 0.0
    %230 = vmatprep.subr.mxu0 0.0
    %231 = vmatpush2.msra.mxu0 0.0
    %232 = vmatprep.subr.mxu0 0.0
    %233 = vmatpush2.msra.mxu0 0.0
    %234 = vmatprep.subr.mxu0 0.0
    %235 = vmatpush2.msra.mxu0 0.0
    %236 = vmatprep.subr.mxu0 0.0
    %237 = vmatpush2.msra.mxu0 0.0
    %238 = vmatprep.subr.mxu0 0.0
    %239 = vmatpush2.msra.mxu0 0.0
    %240 = vmatprep.mubr.f32.mxu0 0.0
    %241 = vmatmul.mubr.f32.gmra.mxu0 %v72
    %v242 = vpop.f32.mrf.mxu0
    %v243 = vadd.f32 %v173, %v242
    %v244 = vpop.f32.mrf.mxu0
    %245 = vdwg.mxu0
    %v246 = vld [vmem:[%s4] sm:$0x1]
    %v248 = vlaneseq
    %v249 = vshrl.u32 %v248, 7
    %v250 = vsub.s32 0, %v249
    %v251 = vrot.slane %v246, %v250
    %v253 = vadd.f32 %v243, %v251
    %v254 = vtanh.pop %v253
    %255 = vst [vmem:[#allocation10] sm:$0xff] %v254
    // Predicated region
    $region38: #{tpu_custom_call.1} parent=1 // pred_check
      _
    $region39: #{tpu_custom_call.1} parent=1 // pred_check_branch
      %257 = sbr.rel (0) target = $region41
    $region40: #{tpu_custom_call.1} parent=1 // pred_region
      %s259 = ssub.s32 128, 128
      %260 = vsyncadd [#allocation4], %s259
      %s262 = sshll.u32 [#allocation10], 4
      %s263 = int_to_ptr.vmem [resolvable:$true] %s262
      %265 = dma.vmem_to_hbm [thread:$0]  %s263, 128, %s5, [#allocation4]
    $region41: #{tpu_custom_call.1} parent=1 // pred_fallthru
      _
    // Predicated region
    $region42: #{tpu_custom_call.1} parent=1 // pred_check
      _
    $region43: #{tpu_custom_call.1} parent=1 // pred_check_branch
      %267 = sbr.rel (0) target = $region45
    $region44: #{tpu_custom_call.1} parent=1 // pred_region
      %268 = dma.done [#allocation4], 128
    $region45: #{tpu_custom_call.1} parent=1 // pred_fallthru
      _
    %269 = vsyncpa [#allocation3], 1
    %270 = vsyncpa [#allocation6], 1
    %271 = vsyncpa [#allocation9], 1
    %272 = vsyncpa [#allocation4], 1

</llo_original>
